<compile_context>
chip_gen: v7x
topology: tpu7x:2x2x1
jax: 0.10.0
libtpu: 0.0.40
codegen_flags: <defaults>
</compile_context>

<pallas_src>
import jax
import jax.numpy as jnp
from jax.experimental import pallas as pl
from jax.experimental.pallas import tpu as pltpu

EMBED_DIMS = (7, 10, 10)
EMBED_SIZE = 256


def _round_up(x, m):
    return (x + m - 1) // m * m


# --------------------------------- kernel ------------------------------------
def sep_lmhead_kernel(x_ref, w_ref, b_ref, o_ref):
    # x_ref: [tm, 3E]   w_ref: [3E, P] (block-diagonal)   b_ref: [1, P]
    # o_ref: [tm, P]    -> one MXU matmul + one lane-dense store per row tile.
    o_ref[...] = (
        jnp.dot(x_ref[...], w_ref[...], preferred_element_type=jnp.float32)
        + b_ref[...]
    ).astype(o_ref.dtype)


# -------------------------------- wrapper -------------------------------------
def sep_lmhead_forward(params, attr_seq_embed):
    """Returns (logits1, logits2, logits3) with shapes [..., d1], [..., d2], [..., d3]."""
    w1, b1 = params["w1"], params["b1"]        # [E, d1], [d1]
    w2, b2 = params["w2"], params["b2"]        # [E, d2], [d2]
    w3, b3 = params["w3"], params["b3"]        # [E, d3], [d3]
    E = w1.shape[0]
    d1, d2, d3 = w1.shape[1], w2.shape[1], w3.shape[1]
    d_total = d1 + d2 + d3

    lead = attr_seq_embed.shape[:-1]
    assert attr_seq_embed.shape[-1] == 3 * E, "expected last dim == 3 * embed_size"

    # --- glue (plain JAX): build the block-diagonal weight, padded to a
    #     lane-dense (multiple-of-128) output width ---
    P = _round_up(max(d_total, 128), 128)
    dtype = attr_seq_embed.dtype
    wc = jnp.zeros((3 * E, P), dtype)
    wc = wc.at[0 * E:1 * E, 0:d1].set(w1.astype(dtype))
    wc = wc.at[1 * E:2 * E, d1:d1 + d2].set(w2.astype(dtype))
    wc = wc.at[2 * E:3 * E, d1 + d2:d_total].set(w3.astype(dtype))
    bc = jnp.zeros((1, P), jnp.float32)
    bc = bc.at[0, 0:d1].set(b1)
    bc = bc.at[0, d1:d1 + d2].set(b2)
    bc = bc.at[0, d1 + d2:d_total].set(b3)

    # --- fold batch/seq into rows; pad rows to a sublane-aligned tile ---
    x2d = attr_seq_embed.reshape(-1, 3 * E)
    rows = x2d.shape[0]
    # Choose a row tile that is a multiple of 8 and gives >= 2 grid blocks when
    # possible (feeds both TensorCores on v7x), capped so large inputs still
    # use big, VMEM-friendly tiles.
    tm = min(256, max(8, _round_up(rows, 16) // 2))
    rows_p = _round_up(rows, tm)
    if rows_p != rows:
        x2d = jnp.pad(x2d, ((0, rows_p - rows), (0, 0)))
    grid = (rows_p // tm,)

    out = pl.pallas_call(
        sep_lmhead_kernel,
        grid=grid,
        in_specs=[
            pl.BlockSpec((tm, 3 * E), lambda i: (i, 0)),   # activations, tiled over rows
            pl.BlockSpec((3 * E, P), lambda i: (0, 0)),    # fused block-diag weight
            pl.BlockSpec((1, P), lambda i: (0, 0)),        # fused bias (2-D)
        ],
        out_specs=pl.BlockSpec((tm, P), lambda i: (i, 0)),
        out_shape=jax.ShapeDtypeStruct((rows_p, P), jnp.float32),
        compiler_params=pltpu.CompilerParams(dimension_semantics=("parallel",)),
    )(x2d, wc, bc)

    out = out[:rows]
    o1 = out[:, 0:d1].reshape(*lead, d1)
    o2 = out[:, d1:d1 + d2].reshape(*lead, d2)
    o3 = out[:, d1 + d2:d_total].reshape(*lead, d3)
    return o1, o2, o3


# --------------------------- pure-JAX reference --------------------------------
def _ref_forward(params, attr_seq_embed):
    E = params["w1"].shape[0]
    hi = jax.lax.Precision.HIGHEST
    e1 = attr_seq_embed[..., 0 * E:1 * E]
    e2 = attr_seq_embed[..., 1 * E:2 * E]
    e3 = attr_seq_embed[..., 2 * E:3 * E]
    o1 = jnp.dot(e1, params["w1"], precision=hi) + params["b1"]
    o2 = jnp.dot(e2, params["w2"], precision=hi) + params["b2"]
    o3 = jnp.dot(e3, params["w3"], precision=hi) + params["b3"]
    return o1, o2, o3


# ------------------------------ parameters -------------------------------------
def init_params(key, embed_dims=EMBED_DIMS, embed_size=EMBED_SIZE):
    ks = jax.random.split(key, 6)

    def linear(kw, kb, din, dout):
        # nn.Linear-style uniform init; weight stored as [in, out] (pre-transposed).
        bound = 1.0 / (din ** 0.5)
        w = jax.random.uniform(kw, (din, dout), jnp.float32, -bound, bound)
        b = jax.random.uniform(kb, (dout,), jnp.float32, -bound, bound)
        return w, b

    w1, b1 = linear(ks[0], ks[1], embed_size, embed_dims[0] + 1)
    w2, b2 = linear(ks[2], ks[3], embed_size, embed_dims[1] + 1)
    w3, b3 = linear(ks[4], ks[5], embed_size, embed_dims[2] + 1)
    return dict(w1=w1, b1=b1, w2=w2, b2=b2, w3=w3, b3=b3)


# --------------------------------- main ----------------------------------------
if __name__ == "__main__":
    key = jax.random.PRNGKey(0)
    kp, kx = jax.random.split(key)
    params = init_params(kp)

    B, S = 2, 8
    attr_seq_embed = jax.random.normal(kx, (B, S, 3 * EMBED_SIZE), jnp.float32)

    o1, o2, o3 = sep_lmhead_forward(params, attr_seq_embed)
    jax.block_until_ready((o1, o2, o3))

    # correctness check against a pure-JAX reference of the same math
    r1, r2, r3 = _ref_forward(params, attr_seq_embed)
    assert o1.shape == (B, S, EMBED_DIMS[0] + 1)
    assert o2.shape == (B, S, EMBED_DIMS[1] + 1)
    assert o3.shape == (B, S, EMBED_DIMS[2] + 1)
    assert jnp.allclose(o1, r1, atol=5e-3, rtol=5e-3)
    assert jnp.allclose(o2, r2, atol=5e-3, rtol=5e-3)
    assert jnp.allclose(o3, r3, atol=5e-3, rtol=5e-3)

    print("KERNEL_OK")
</pallas_src>

<mosaic_0001>
module attributes {stable_mosaic.version = 11 : i64} {
  func.func @sep_lmhead_kernel(%arg0: i32, %arg1: memref<8x768xf32, #tpu.memory_space<vmem>>, %arg2: memref<768x128xf32, #tpu.memory_space<vmem>>, %arg3: memref<1x128xf32, #tpu.memory_space<vmem>>, %arg4: memref<8x128xf32, #tpu.memory_space<vmem>>) attributes {dimension_semantics = [#tpu.dimension_semantics<parallel>], iteration_bounds = array<i64: 2>, scalar_prefetch = 0 : i64, scratch_operands = 0 : i64, tpu.core_type = #tpu.core_type<tc>, window_params = [{transform_indices = @transform_0, window_bounds = array<i64: 8, 768>}, {pipeline_mode = #tpu.pipeline_mode<synchronous>, transform_indices = @transform_1, window_bounds = array<i64: 768, 128>}, {pipeline_mode = #tpu.pipeline_mode<synchronous>, transform_indices = @transform_2, window_bounds = array<i64: 1, 128>}, {transform_indices = @transform_3, window_bounds = array<i64: 8, 128>}]} {
    %c0 = arith.constant 0 : index
    %c0_0 = arith.constant 0 : index
    %0 = vector.load %arg1[%c0, %c0_0] : memref<8x768xf32, #tpu.memory_space<vmem>>, vector<8x768xf32>
    %c0_1 = arith.constant 0 : index
    %c0_2 = arith.constant 0 : index
    %1 = vector.load %arg2[%c0_1, %c0_2] : memref<768x128xf32, #tpu.memory_space<vmem>>, vector<768x128xf32>
    %cst = arith.constant dense<0.000000e+00> : vector<8x128xf32>
    %2 = tpu.matmul %0, %1, %cst {dimension_numbers = #tpu.dot_dimension_numbers<[1], [0], [0], [1], [0, 0, 1, 1], [], []>} : vector<8x768xf32>, vector<768x128xf32>, vector<8x128xf32> -> vector<8x128xf32>
    %c0_3 = arith.constant 0 : index
    %c0_4 = arith.constant 0 : index
    %3 = vector.load %arg3[%c0_3, %c0_4] : memref<1x128xf32, #tpu.memory_space<vmem>>, vector<1x128xf32>
    %4 = vector.broadcast %3 : vector<1x128xf32> to vector<8x128xf32>
    %5 = arith.addf %2, %4 : vector<8x128xf32>
    %c0_5 = arith.constant 0 : index
    %c0_6 = arith.constant 0 : index
    %6 = vector.load %arg4[%c0_5, %c0_6] : memref<8x128xf32, #tpu.memory_space<vmem>>, vector<8x128xf32>
    tpu.vector_store %arg4[%c0_5, %c0_6], %5 {strides = array<i32>} : memref<8x128xf32, #tpu.memory_space<vmem>>, vector<8x128xf32>,
    return
  }
  func.func @transform_0(%arg0: i32) -> (i32, i32) {
    %c0_i32 = arith.constant 0 : i32
    %c0_i32_0 = arith.constant 0 : i32
    return %arg0, %c0_i32 : i32, i32
  }
  func.func @transform_1(%arg0: i32) -> (i32, i32) {
    %c0_i32 = arith.constant 0 : i32
    %c0_i32_0 = arith.constant 0 : i32
    %c0_i32_1 = arith.constant 0 : i32
    return %c0_i32, %c0_i32_0 : i32, i32
  }
  func.func @transform_2(%arg0: i32) -> (i32, i32) {
    %c0_i32 = arith.constant 0 : i32
    %c0_i32_0 = arith.constant 0 : i32
    %c0_i32_1 = arith.constant 0 : i32
    return %c0_i32, %c0_i32_0 : i32, i32
  }
  func.func @transform_3(%arg0: i32) -> (i32, i32) {
    %c0_i32 = arith.constant 0 : i32
    %c0_i32_0 = arith.constant 0 : i32
    return %arg0, %c0_i32 : i32, i32
  }
}

</mosaic_0001>

<llo_original>
// kernel: tpu_custom_call.1
$region0: #{tpu_custom_call.1}
  #allocation0 [shape = 'u32[]', space=smem, size = 0x4, offset = 0x4, fixed_abs, tag = 'smem constant byte address 0x4 - core index']
  #allocation1 [shape = 'u32[144,128]{1,0:T(1,128)}', space=vmem, size = 0x12000, scoped, tag = 'internal scratch']
  %s0 = inlined_call_operand.hbm [shape: f32[16,768], index: 0, kind: input, shape index: {}]
  %s1 = inlined_call_operand.hbm [shape: f32[768,128], index: 1, kind: input, shape index: {}]
  %s2 = inlined_call_operand.vmem [shape: f32[1,128], index: 2, kind: input, shape index: {}]
  %s3 = inlined_call_operand.hbm [shape: f32[16,128], index: 3, kind: output, shape index: {}]
  %s4 = sld [smem:[#allocation0]]
  $region53: #{tpu_custom_call.1} parent=0
    _
  %s6 = ssub.s32 1, %s4
  %s7 = scalar_select 0, %s6, %s4
  $region1: #{tpu_custom_call.1} parent=0
    #allocation2 [shape = 'u8[49152]{0}', space=vmem, size = 0xc000, scoped, tag = 'input window, operand 0']
    #allocation3 [shape = 's32[2]{0}', space=sflag, size = 0x8, scoped, tag = 'scoped memory for tpu_custom_call.1']
    #allocation4 [shape = 's32[2]{0}', space=sflag, size = 0x8, scoped, tag = 'scoped memory for tpu_custom_call.1']
    #allocation5 [shape = 'u8[393216]{0}', space=vmem, size = 0x60000, scoped, tag = 'input window, operand 1, single buffered']
    #allocation6 [shape = 's32[1]{0}', space=sflag, size = 0x4, scoped, tag = 'scoped memory for tpu_custom_call.1']
    #allocation7 [shape = 'u8[8192]{0}', space=vmem, size = 0x2000, scoped, tag = 'output window, operand 0']
    %8 = vsyncpa [#allocation3], 0
    %s9 = scalar_lea.sflag [#allocation3], 1
    %10 = vsyncpa %s9, 0
    %11 = vsyncpa [#allocation6], 0
    %12 = vsyncpa [#allocation4], 0
    %s13 = scalar_lea.sflag [#allocation4], 1
    %14 = vsyncpa %s13, 0
    loop: start=0, step=1, limit=4
    $region2: #{tpu_custom_call.1} parent=1 // loop_pre_header
      _
    $region3: #{tpu_custom_call.1} parent=1 // loop_header
      %s16 = sphi 0, %s20
      %p17 = scmp.ge.s32.totalorder %s16, 4
      %s26 = sphi 0, %s28
      %s29 = sphi 0, %s26
      %s30 = sphi 0, %s29
      %s46 = sphi 0, %s30
      %s50 = sphi 0, %s50
      %s52 = sphi 0, %s50
      %s53 = sphi 0, %s52
      %s67 = sphi 0, %s53
      %s71 = sphi 0, %s71
      %s73 = sphi 0, %s71
      %s74 = sphi 0, %s73
      %s88 = sphi 0, %s74
      %s94 = sphi 0, %s96
      %s97 = sphi 0, %s94
      %s98 = sphi 0, %s97
      %s114 = sphi 0, %s98
    $region4: #{tpu_custom_call.1} parent=1 // loop_header_branch
      %19 = sbr.rel (%p17) target = $region8
    $region5: #{tpu_custom_call.1} parent=1 // loop_body
      %s21 = ssub.s32 %s16, 1
      %s22 = ssub.s32 %s16, 2
      %s23 = sadd.s32 %s16, 1
      %s24 = ssub.s32 %s16, %s23
      %p25 = scmp.eq.s32.totalorder %s24, 0
      %s27 = sadd.s32 %s26, 1
      %s28 = scalar_select %p25, %s26, %s27
      %p31 = pneg %p25
      %p32 = scmp.eq.s32.totalorder %s16, 1
      %p33 = por %p31, %p32
      %p34 = scmp.ne.s32.totalorder %s26, %s29
      %p35 = scmp.eq.s32.totalorder %s16, 0
      %p36 = por %p34, %p35
      %p37 = scmp.ne.s32.totalorder %s26, %s29
      %p38 = scmp.eq.s32.totalorder %s21, 1
      %p39 = por %p37, %p38
      %p40 = scmp.ne.s32.totalorder %s29, %s30
      %p41 = scmp.eq.s32.totalorder %s21, 0
      %p42 = por %p40, %p41
      %p43 = scmp.ne.s32.totalorder %s29, %s30
      %p44 = scmp.eq.s32.totalorder %s22, 1
      %p45 = por %p43, %p44
      %p47 = scmp.ne.s32.totalorder %s30, %s46
      %p48 = scmp.eq.s32.totalorder %s22, 0
      %p49 = por %p47, %p48
      %s51 = sadd.s32 %s50, 1
      %p54 = scmp.eq.s32.totalorder %s16, 1
      %p55 = scmp.ne.s32.totalorder %s50, %s52
      %p56 = scmp.eq.s32.totalorder %s16, 0
      %p57 = por %p55, %p56
      %p58 = scmp.ne.s32.totalorder %s50, %s52
      %p59 = scmp.eq.s32.totalorder %s21, 1
      %p60 = por %p58, %p59
      %p61 = scmp.ne.s32.totalorder %s52, %s53
      %p62 = scmp.eq.s32.totalorder %s21, 0
      %p63 = por %p61, %p62
      %p64 = scmp.ne.s32.totalorder %s52, %s53
      %p65 = scmp.eq.s32.totalorder %s22, 1
      %p66 = por %p64, %p65
      %p68 = scmp.ne.s32.totalorder %s53, %s67
      %p69 = scmp.eq.s32.totalorder %s22, 0
      %p70 = por %p68, %p69
      %s72 = sadd.s32 %s71, 1
      %p75 = scmp.eq.s32.totalorder %s16, 1
      %p76 = scmp.ne.s32.totalorder %s71, %s73
      %p77 = scmp.eq.s32.totalorder %s16, 0
      %p78 = por %p76, %p77
      %p79 = scmp.ne.s32.totalorder %s71, %s73
      %p80 = scmp.eq.s32.totalorder %s21, 1
      %p81 = por %p79, %p80
      %p82 = scmp.ne.s32.totalorder %s73, %s74
      %p83 = scmp.eq.s32.totalorder %s21, 0
      %p84 = por %p82, %p83
      %p85 = scmp.ne.s32.totalorder %s73, %s74
      %p86 = scmp.eq.s32.totalorder %s22, 1
      %p87 = por %p85, %p86
      %p89 = scmp.ne.s32.totalorder %s74, %s88
      %p90 = scmp.eq.s32.totalorder %s22, 0
      %p91 = por %p89, %p90
      %s92 = ssub.s32 %s16, %s23
      %p93 = scmp.eq.s32.totalorder %s92, 0
      %s95 = sadd.s32 %s94, 1
      %s96 = scalar_select %p93, %s94, %s95
      %p99 = pneg %p93
      %p100 = scmp.eq.s32.totalorder %s16, 1
      %p101 = por %p99, %p100
      %p102 = scmp.ne.s32.totalorder %s94, %s97
      %p103 = scmp.eq.s32.totalorder %s16, 0
      %p104 = por %p102, %p103
      %p105 = scmp.ne.s32.totalorder %s94, %s97
      %p106 = scmp.eq.s32.totalorder %s21, 1
      %p107 = por %p105, %p106
      %p108 = scmp.ne.s32.totalorder %s97, %s98
      %p109 = scmp.eq.s32.totalorder %s21, 0
      %p110 = por %p108, %p109
      %p111 = scmp.ne.s32.totalorder %s97, %s98
      %p112 = scmp.eq.s32.totalorder %s22, 1
      %p113 = por %p111, %p112
      %p115 = scmp.ne.s32.totalorder %s98, %s114
      %p116 = scmp.eq.s32.totalorder %s22, 0
      %p117 = por %p115, %p116
      %p118 = scmp.le.s32.totalorder 1, %s16
      %p119 = scmp.lt.s32.totalorder %s16, 3
      %p120 = pnand %p118, %p119
      %p121 = pneg %p120
      // Predicated region
      $region9: #{tpu_custom_call.1} parent=5 // pred_check
        _
      $region10: #{tpu_custom_call.1} parent=5 // pred_check_branch
        %123 = sbr.rel (%p120) target = $region12
      $region11: #{tpu_custom_call.1} parent=5 // pred_region
        %s124 = ssub.s32 %s16, 1
        // Predicated region
        $region13: #{tpu_custom_call.1} parent=11 // pred_check
          %p125 = pneg %p63
        $region14: #{tpu_custom_call.1} parent=11 // pred_check_branch
          %127 = sbr.rel (%p125) target = $region16
        $region15: #{tpu_custom_call.1} parent=11 // pred_region
          %s129 = ssub.s32 12288, 12288
          %130 = vsyncadd [#allocation6], %s129
          %s131 = sshll.u32 [#allocation5], 4
          %s132 = int_to_ptr.vmem [resolvable:$true] %s131
          %137 = dma.hbm_to_vmem [thread:$0]  %s1, 12288, %s132, [#allocation6], 128, 128, 8
        $region16: #{tpu_custom_call.1} parent=11 // pred_fallthru
          _
        // Predicated region
        $region17: #{tpu_custom_call.1} parent=11 // pred_check
          %p138 = pneg %p84
        $region18: #{tpu_custom_call.1} parent=11 // pred_check_branch
          %140 = sbr.rel (%p138) target = $region20
        $region19: #{tpu_custom_call.1} parent=11 // pred_region
          _
        $region20: #{tpu_custom_call.1} parent=11 // pred_fallthru
          _
      $region12: #{tpu_custom_call.1} parent=5 // pred_fallthru
        _
      %p141 = scmp.lt.s32.totalorder %s16, 2
      // Predicated region
      $region21: #{tpu_custom_call.1} parent=5 // pred_check
        %p142 = pneg %p141
      $region22: #{tpu_custom_call.1} parent=5 // pred_check_branch
        %144 = sbr.rel (%p142) target = $region24
      $region23: #{tpu_custom_call.1} parent=5 // pred_region
        // Predicated region
        $region25: #{tpu_custom_call.1} parent=23 // pred_check
          %p145 = pneg %p36
        $region26: #{tpu_custom_call.1} parent=23 // pred_check_branch
          %147 = sbr.rel (%p145) target = $region28
        $region27: #{tpu_custom_call.1} parent=23 // pred_region
          %s148 = sand.u32 %s26, 1
          %s149 = scalar_lea.sflag [#allocation3], %s148
          %s150 = sand.u32 %s26, 1
          %s151 = smul.addr %s150, 48
          %s152 = scalar_lea.vmem [#allocation2], %s151
          %s154 = ssub.s32 768, 768
          %155 = vsyncadd %s149, %s154
          %s156 = smul.addr %s16, 6
          %s157 = smul.addr %s156, 128
          %s158 = scalar_lea.hbm %s0, %s157
          %s160 = sshll.u32 %s152, 4
          %s161 = int_to_ptr.vmem [resolvable:$true] %s160
          %163 = dma.hbm_to_vmem [thread:$0]  %s158, 768, %s161, %s149
        $region28: #{tpu_custom_call.1} parent=23 // pred_fallthru
          _
      $region24: #{tpu_custom_call.1} parent=5 // pred_fallthru
        _
      %p164 = scmp.le.s32.totalorder 1, %s16
      %p165 = scmp.lt.s32.totalorder %s16, 3
      %p166 = pnand %p164, %p165
      %p167 = pneg %p166
      // Predicated region
      $region29: #{tpu_custom_call.1} parent=5 // pred_check
        _
      $region30: #{tpu_custom_call.1} parent=5 // pred_check_branch
        %169 = sbr.rel (%p166) target = $region32
      $region31: #{tpu_custom_call.1} parent=5 // pred_region
        %s170 = ssub.s32 %s16, 1
        %s171 = sand.u32 %s29, 1
        %s172 = scalar_lea.sflag [#allocation3], %s171
        %s173 = sand.u32 %s29, 1
        %s174 = smul.addr %s173, 48
        %s175 = scalar_lea.vmem [#allocation2], %s174
        // Predicated region
        $region33: #{tpu_custom_call.1} parent=31 // pred_check
          %p176 = pneg %p42
        $region34: #{tpu_custom_call.1} parent=31 // pred_check_branch
          %178 = sbr.rel (%p176) target = $region36
        $region35: #{tpu_custom_call.1} parent=31 // pred_region
          %179 = dma.done %s172, 768
        $region36: #{tpu_custom_call.1} parent=31 // pred_fallthru
          _
        // Predicated region
        $region37: #{tpu_custom_call.1} parent=31 // pred_check
          %p180 = pneg %p63
        $region38: #{tpu_custom_call.1} parent=31 // pred_check_branch
          %182 = sbr.rel (%p180) target = $region40
        $region39: #{tpu_custom_call.1} parent=31 // pred_region
          %183 = dma.done [#allocation6], 12288
        $region40: #{tpu_custom_call.1} parent=31 // pred_fallthru
          _
        %s184 = sand.u32 %s29, 1
        %s185 = scalar_lea.sflag [#allocation3], %s184
        %s186 = sand.u32 %s29, 1
        %s187 = smul.addr %s186, 48
        %s188 = scalar_lea.vmem [#allocation2], %s187
        %p189 = pneg %p42
        %p190 = pneg %p39
        %p191 = pneg %p63
        %p192 = pneg %p60
        %p193 = pneg %p84
        %p194 = pneg %p81
        %p195 = pneg %p110
        %p196 = pneg %p107
        %s197 = sand.u32 %s97, 1
        %s198 = scalar_lea.sflag [#allocation4], %s197
        %s199 = sand.u32 %s97, 1
        %s200 = smul.addr %s199, 8
        %s201 = scalar_lea.vmem [#allocation7], %s200
        %v202 = vld [vmem:[%s175] sm:$0xff]
        %v203 = vld [vmem:[%s175 + $0x8] sm:$0xff]
        %v204 = vld [vmem:[%s175 + $0x10] sm:$0xff]
        %v205 = vld [vmem:[%s175 + $0x18] sm:$0xff]
        %v206 = vld [vmem:[%s175 + $0x20] sm:$0xff]
        %v207 = vld [vmem:[%s175 + $0x28] sm:$0xff]
        %v208 = vld [vmem:[#allocation5] sm:$0xff]
        %v209 = vld [vmem:[#allocation5 + $0x8] sm:$0xff]
        %v210 = vld [vmem:[#allocation5 + $0x10] sm:$0xff]
        %v211 = vld [vmem:[#allocation5 + $0x18] sm:$0xff]
        %v212 = vld [vmem:[#allocation5 + $0x20] sm:$0xff]
        %v213 = vld [vmem:[#allocation5 + $0x28] sm:$0xff]
        %v214 = vld [vmem:[#allocation5 + $0x30] sm:$0xff]
        %v215 = vld [vmem:[#allocation5 + $0x38] sm:$0xff]
        %v216 = vld [vmem:[#allocation5 + $0x40] sm:$0xff]
        %v217 = vld [vmem:[#allocation5 + $0x48] sm:$0xff]
        %v218 = vld [vmem:[#allocation5 + $0x50] sm:$0xff]
        %v219 = vld [vmem:[#allocation5 + $0x58] sm:$0xff]
        %v220 = vld [vmem:[#allocation5 + $0x60] sm:$0xff]
        %v221 = vld [vmem:[#allocation5 + $0x68] sm:$0xff]
        %v222 = vld [vmem:[#allocation5 + $0x70] sm:$0xff]
        %v223 = vld [vmem:[#allocation5 + $0x78] sm:$0xff]
        %v224 = vld [vmem:[#allocation5 + $0x80] sm:$0xff]
        %v225 = vld [vmem:[#allocation5 + $0x88] sm:$0xff]
        %v226 = vld [vmem:[#allocation5 + $0x90] sm:$0xff]
        %v227 = vld [vmem:[#allocation5 + $0x98] sm:$0xff]
        %v228 = vld [vmem:[#allocation5 + $0xa0] sm:$0xff]
        %v229 = vld [vmem:[#allocation5 + $0xa8] sm:$0xff]
        %v230 = vld [vmem:[#allocation5 + $0xb0] sm:$0xff]
        %v231 = vld [vmem:[#allocation5 + $0xb8] sm:$0xff]
        %v232 = vld [vmem:[#allocation5 + $0xc0] sm:$0xff]
        %v233 = vld [vmem:[#allocation5 + $0xc8] sm:$0xff]
        %v234 = vld [vmem:[#allocation5 + $0xd0] sm:$0xff]
        %v235 = vld [vmem:[#allocation5 + $0xd8] sm:$0xff]
        %v236 = vld [vmem:[#allocation5 + $0xe0] sm:$0xff]
        %v237 = vld [vmem:[#allocation5 + $0xe8] sm:$0xff]
        %v238 = vld [vmem:[#allocation5 + $0xf0] sm:$0xff]
        %v239 = vld [vmem:[#allocation5 + $0xf8] sm:$0xff]
        %v240 = vld [vmem:[#allocation5 + $0x100] sm:$0xff]
        %v241 = vld [vmem:[#allocation5 + $0x108] sm:$0xff]
        %v242 = vld [vmem:[#allocation5 + $0x110] sm:$0xff]
        %v243 = vld [vmem:[#allocation5 + $0x118] sm:$0xff]
        %v244 = vld [vmem:[#allocation5 + $0x120] sm:$0xff]
        %v245 = vld [vmem:[#allocation5 + $0x128] sm:$0xff]
        %v246 = vld [vmem:[#allocation5 + $0x130] sm:$0xff]
        %v247 = vld [vmem:[#allocation5 + $0x138] sm:$0xff]
        %v248 = vld [vmem:[#allocation5 + $0x140] sm:$0xff]
        %v249 = vld [vmem:[#allocation5 + $0x148] sm:$0xff]
        %v250 = vld [vmem:[#allocation5 + $0x150] sm:$0xff]
        %v251 = vld [vmem:[#allocation5 + $0x158] sm:$0xff]
        %v252 = vld [vmem:[#allocation5 + $0x160] sm:$0xff]
        %v253 = vld [vmem:[#allocation5 + $0x168] sm:$0xff]
        %v254 = vld [vmem:[#allocation5 + $0x170] sm:$0xff]
        %v255 = vld [vmem:[#allocation5 + $0x178] sm:$0xff]
        %v256 = vld [vmem:[#allocation5 + $0x180] sm:$0xff]
        %v257 = vld [vmem:[#allocation5 + $0x188] sm:$0xff]
        %v258 = vld [vmem:[#allocation5 + $0x190] sm:$0xff]
        %v259 = vld [vmem:[#allocation5 + $0x198] sm:$0xff]
        %v260 = vld [vmem:[#allocation5 + $0x1a0] sm:$0xff]
        %v261 = vld [vmem:[#allocation5 + $0x1a8] sm:$0xff]
        %v262 = vld [vmem:[#allocation5 + $0x1b0] sm:$0xff]
        %v263 = vld [vmem:[#allocation5 + $0x1b8] sm:$0xff]
        %v264 = vld [vmem:[#allocation5 + $0x1c0] sm:$0xff]
        %v265 = vld [vmem:[#allocation5 + $0x1c8] sm:$0xff]
        %v266 = vld [vmem:[#allocation5 + $0x1d0] sm:$0xff]
        %v267 = vld [vmem:[#allocation5 + $0x1d8] sm:$0xff]
        %v268 = vld [vmem:[#allocation5 + $0x1e0] sm:$0xff]
        %v269 = vld [vmem:[#allocation5 + $0x1e8] sm:$0xff]
        %v270 = vld [vmem:[#allocation5 + $0x1f0] sm:$0xff]
        %v271 = vld [vmem:[#allocation5 + $0x1f8] sm:$0xff]
        %v272 = vld [vmem:[#allocation5 + $0x200] sm:$0xff]
        %v273 = vld [vmem:[#allocation5 + $0x208] sm:$0xff]
        %v274 = vld [vmem:[#allocation5 + $0x210] sm:$0xff]
        %v275 = vld [vmem:[#allocation5 + $0x218] sm:$0xff]
        %v276 = vld [vmem:[#allocation5 + $0x220] sm:$0xff]
        %v277 = vld [vmem:[#allocation5 + $0x228] sm:$0xff]
        %v278 = vld [vmem:[#allocation5 + $0x230] sm:$0xff]
        %v279 = vld [vmem:[#allocation5 + $0x238] sm:$0xff]
        %v280 = vld [vmem:[#allocation5 + $0x240] sm:$0xff]
        %v281 = vld [vmem:[#allocation5 + $0x248] sm:$0xff]
        %v282 = vld [vmem:[#allocation5 + $0x250] sm:$0xff]
        %v283 = vld [vmem:[#allocation5 + $0x258] sm:$0xff]
        %v284 = vld [vmem:[#allocation5 + $0x260] sm:$0xff]
        %v285 = vld [vmem:[#allocation5 + $0x268] sm:$0xff]
        %v286 = vld [vmem:[#allocation5 + $0x270] sm:$0xff]
        %v287 = vld [vmem:[#allocation5 + $0x278] sm:$0xff]
        %v288 = vld [vmem:[#allocation5 + $0x280] sm:$0xff]
        %v289 = vld [vmem:[#allocation5 + $0x288] sm:$0xff]
        %v290 = vld [vmem:[#allocation5 + $0x290] sm:$0xff]
        %v291 = vld [vmem:[#allocation5 + $0x298] sm:$0xff]
        %v292 = vld [vmem:[#allocation5 + $0x2a0] sm:$0xff]
        %v293 = vld [vmem:[#allocation5 + $0x2a8] sm:$0xff]
        %v294 = vld [vmem:[#allocation5 + $0x2b0] sm:$0xff]
        %v295 = vld [vmem:[#allocation5 + $0x2b8] sm:$0xff]
        %v296 = vld [vmem:[#allocation5 + $0x2c0] sm:$0xff]
        %v297 = vld [vmem:[#allocation5 + $0x2c8] sm:$0xff]
        %v298 = vld [vmem:[#allocation5 + $0x2d0] sm:$0xff]
        %v299 = vld [vmem:[#allocation5 + $0x2d8] sm:$0xff]
        %v300 = vld [vmem:[#allocation5 + $0x2e0] sm:$0xff]
        %v301 = vld [vmem:[#allocation5 + $0x2e8] sm:$0xff]
        %v302 = vld [vmem:[#allocation5 + $0x2f0] sm:$0xff]
        %v303 = vld [vmem:[#allocation5 + $0x2f8] sm:$0xff]
        %v304 = vld [vmem:[%s2] sm:$0x1]
        %v306 = vlaneseq
        %v307 = vshrl.u32 %v306, 7
        %v308 = vsub.s32 0, %v307
        %v309 = vrot.slane %v304, %v308
        %311 = vmatprep.subr.mxu0 0.0
        %312 = vmatpush1.msra.mxu0 %v208
        %313 = vmatprep.subr.mxu0 0.0
        %314 = vmatpush1.msra.mxu0 %v209
        %315 = vmatprep.subr.mxu0 0.0
        %316 = vmatpush1.msra.mxu0 %v210
        %317 = vmatprep.subr.mxu0 0.0
        %318 = vmatpush1.msra.mxu0 %v211
        %319 = vmatprep.subr.mxu0 0.0
        %320 = vmatpush1.msra.mxu0 %v212
        %321 = vmatprep.subr.mxu0 0.0
        %322 = vmatpush1.msra.mxu0 %v213
        %323 = vmatprep.subr.mxu0 0.0
        %324 = vmatpush1.msra.mxu0 %v214
        %325 = vmatprep.subr.mxu0 0.0
        %326 = vmatpush1.msra.mxu0 %v215
        %327 = vmatprep.subr.mxu0 0.0
        %328 = vmatpush1.msra.mxu0 %v216
        %329 = vmatprep.subr.mxu0 0.0
        %330 = vmatpush1.msra.mxu0 %v217
        %331 = vmatprep.subr.mxu0 0.0
        %332 = vmatpush1.msra.mxu0 %v218
        %333 = vmatprep.subr.mxu0 0.0
        %334 = vmatpush1.msra.mxu0 %v219
        %335 = vmatprep.subr.mxu0 0.0
        %336 = vmatpush1.msra.mxu0 %v220
        %337 = vmatprep.subr.mxu0 0.0
        %338 = vmatpush1.msra.mxu0 %v221
        %339 = vmatprep.subr.mxu0 0.0
        %340 = vmatpush1.msra.mxu0 %v222
        %341 = vmatprep.subr.mxu0 0.0
        %342 = vmatpush1.msra.mxu0 %v223
        %343 = vmatprep.subr.mxu0 0.0
        %344 = vmatpush1.msra.mxu0 %v224
        %345 = vmatprep.subr.mxu0 0.0
        %346 = vmatpush1.msra.mxu0 %v225
        %347 = vmatprep.subr.mxu0 0.0
        %348 = vmatpush1.msra.mxu0 %v226
        %349 = vmatprep.subr.mxu0 0.0
        %350 = vmatpush1.msra.mxu0 %v227
        %351 = vmatprep.subr.mxu0 0.0
        %352 = vmatpush1.msra.mxu0 %v228
        %353 = vmatprep.subr.mxu0 0.0
        %354 = vmatpush1.msra.mxu0 %v229
        %355 = vmatprep.subr.mxu0 0.0
        %356 = vmatpush1.msra.mxu0 %v230
        %357 = vmatprep.subr.mxu0 0.0
        %358 = vmatpush1.msra.mxu0 %v231
        %359 = vmatprep.subr.mxu0 0.0
        %360 = vmatpush1.msra.mxu0 %v232
        %361 = vmatprep.subr.mxu0 0.0
        %362 = vmatpush1.msra.mxu0 %v233
        %363 = vmatprep.subr.mxu0 0.0
        %364 = vmatpush1.msra.mxu0 %v234
        %365 = vmatprep.subr.mxu0 0.0
        %366 = vmatpush1.msra.mxu0 %v235
        %367 = vmatprep.subr.mxu0 0.0
        %368 = vmatpush1.msra.mxu0 %v236
        %369 = vmatprep.subr.mxu0 0.0
        %370 = vmatpush1.msra.mxu0 %v237
        %371 = vmatprep.subr.mxu0 0.0
        %372 = vmatpush1.msra.mxu0 %v238
        %373 = vmatprep.subr.mxu0 0.0
        %374 = vmatpush1.msra.mxu0 %v239
        %375 = vmatprep.mubr.f32.mxu0 %v203
        %376 = vmatmul.mubr.f32.gmra.mrb[0].mxu0 %v202
        %v377 = vpop.f32.mrb[0].mxu0
        %v378 = vadd.f32 %v309, %v377
        %v379 = vpop.f32.mrb[0].mxu0
        %380 = vdwg.mxu0
        %381 = vmatprep.subr.mxu0 0.0
        %382 = vmatpush1.msra.mxu0 %v240
        %383 = vmatprep.subr.mxu0 0.0
        %384 = vmatpush1.msra.mxu0 %v241
        %385 = vmatprep.subr.mxu0 0.0
        %386 = vmatpush1.msra.mxu0 %v242
        %387 = vmatprep.subr.mxu0 0.0
        %388 = vmatpush1.msra.mxu0 %v243
        %389 = vmatprep.subr.mxu0 0.0
        %390 = vmatpush1.msra.mxu0 %v244
        %391 = vmatprep.subr.mxu0 0.0
        %392 = vmatpush1.msra.mxu0 %v245
        %393 = vmatprep.subr.mxu0 0.0
        %394 = vmatpush1.msra.mxu0 %v246
        %395 = vmatprep.subr.mxu0 0.0
        %396 = vmatpush1.msra.mxu0 %v247
        %397 = vmatprep.subr.mxu0 0.0
        %398 = vmatpush1.msra.mxu0 %v248
        %399 = vmatprep.subr.mxu0 0.0
        %400 = vmatpush1.msra.mxu0 %v249
        %401 = vmatprep.subr.mxu0 0.0
        %402 = vmatpush1.msra.mxu0 %v250
        %403 = vmatprep.subr.mxu0 0.0
        %404 = vmatpush1.msra.mxu0 %v251
        %405 = vmatprep.subr.mxu0 0.0
        %406 = vmatpush1.msra.mxu0 %v252
        %407 = vmatprep.subr.mxu0 0.0
        %408 = vmatpush1.msra.mxu0 %v253
        %409 = vmatprep.subr.mxu0 0.0
        %410 = vmatpush1.msra.mxu0 %v254
        %411 = vmatprep.subr.mxu0 0.0
        %412 = vmatpush1.msra.mxu0 %v255
        %413 = vmatprep.subr.mxu0 0.0
        %414 = vmatpush1.msra.mxu0 %v256
        %415 = vmatprep.subr.mxu0 0.0
        %416 = vmatpush1.msra.mxu0 %v257
        %417 = vmatprep.subr.mxu0 0.0
        %418 = vmatpush1.msra.mxu0 %v258
        %419 = vmatprep.subr.mxu0 0.0
        %420 = vmatpush1.msra.mxu0 %v259
        %421 = vmatprep.subr.mxu0 0.0
        %422 = vmatpush1.msra.mxu0 %v260
        %423 = vmatprep.subr.mxu0 0.0
        %424 = vmatpush1.msra.mxu0 %v261
        %425 = vmatprep.subr.mxu0 0.0
        %426 = vmatpush1.msra.mxu0 %v262
        %427 = vmatprep.subr.mxu0 0.0
        %428 = vmatpush1.msra.mxu0 %v263
        %429 = vmatprep.subr.mxu0 0.0
        %430 = vmatpush1.msra.mxu0 %v264
        %431 = vmatprep.subr.mxu0 0.0
        %432 = vmatpush1.msra.mxu0 %v265
        %433 = vmatprep.subr.mxu0 0.0
        %434 = vmatpush1.msra.mxu0 %v266
        %435 = vmatprep.subr.mxu0 0.0
        %436 = vmatpush1.msra.mxu0 %v267
        %437 = vmatprep.subr.mxu0 0.0
        %438 = vmatpush1.msra.mxu0 %v268
        %439 = vmatprep.subr.mxu0 0.0
        %440 = vmatpush1.msra.mxu0 %v269
        %441 = vmatprep.subr.mxu0 0.0
        %442 = vmatpush1.msra.mxu0 %v270
        %443 = vmatprep.subr.mxu0 0.0
        %444 = vmatpush1.msra.mxu0 %v271
        %445 = vmatprep.mubr.f32.mxu0 %v205
        %446 = vmatmul.mubr.f32.gmra.mrb[0].mxu0 %v204
        %v447 = vpop.f32.mrb[0].mxu0
        %v448 = vadd.f32 %v378, %v447
        %v449 = vpop.f32.mrb[0].mxu0
        %450 = vdwg.mxu0
        %451 = vmatprep.subr.mxu0 0.0
        %452 = vmatpush1.msra.mxu0 %v272
        %453 = vmatprep.subr.mxu0 0.0
        %454 = vmatpush1.msra.mxu0 %v273
        %455 = vmatprep.subr.mxu0 0.0
        %456 = vmatpush1.msra.mxu0 %v274
        %457 = vmatprep.subr.mxu0 0.0
        %458 = vmatpush1.msra.mxu0 %v275
        %459 = vmatprep.subr.mxu0 0.0
        %460 = vmatpush1.msra.mxu0 %v276
        %461 = vmatprep.subr.mxu0 0.0
        %462 = vmatpush1.msra.mxu0 %v277
        %463 = vmatprep.subr.mxu0 0.0
        %464 = vmatpush1.msra.mxu0 %v278
        %465 = vmatprep.subr.mxu0 0.0
        %466 = vmatpush1.msra.mxu0 %v279
        %467 = vmatprep.subr.mxu0 0.0
        %468 = vmatpush1.msra.mxu0 %v280
        %469 = vmatprep.subr.mxu0 0.0
        %470 = vmatpush1.msra.mxu0 %v281
        %471 = vmatprep.subr.mxu0 0.0
        %472 = vmatpush1.msra.mxu0 %v282
        %473 = vmatprep.subr.mxu0 0.0
        %474 = vmatpush1.msra.mxu0 %v283
        %475 = vmatprep.subr.mxu0 0.0
        %476 = vmatpush1.msra.mxu0 %v284
        %477 = vmatprep.subr.mxu0 0.0
        %478 = vmatpush1.msra.mxu0 %v285
        %479 = vmatprep.subr.mxu0 0.0
        %480 = vmatpush1.msra.mxu0 %v286
        %481 = vmatprep.subr.mxu0 0.0
        %482 = vmatpush1.msra.mxu0 %v287
        %483 = vmatprep.subr.mxu0 0.0
        %484 = vmatpush1.msra.mxu0 %v288
        %485 = vmatprep.subr.mxu0 0.0
        %486 = vmatpush1.msra.mxu0 %v289
        %487 = vmatprep.subr.mxu0 0.0
        %488 = vmatpush1.msra.mxu0 %v290
        %489 = vmatprep.subr.mxu0 0.0
        %490 = vmatpush1.msra.mxu0 %v291
        %491 = vmatprep.subr.mxu0 0.0
        %492 = vmatpush1.msra.mxu0 %v292
        %493 = vmatprep.subr.mxu0 0.0
        %494 = vmatpush1.msra.mxu0 %v293
        %495 = vmatprep.subr.mxu0 0.0
        %496 = vmatpush1.msra.mxu0 %v294
        %497 = vmatprep.subr.mxu0 0.0
        %498 = vmatpush1.msra.mxu0 %v295
        %499 = vmatprep.subr.mxu0 0.0
        %500 = vmatpush1.msra.mxu0 %v296
        %501 = vmatprep.subr.mxu0 0.0
        %502 = vmatpush1.msra.mxu0 %v297
        %503 = vmatprep.subr.mxu0 0.0
        %504 = vmatpush1.msra.mxu0 %v298
        %505 = vmatprep.subr.mxu0 0.0
        %506 = vmatpush1.msra.mxu0 %v299
        %507 = vmatprep.subr.mxu0 0.0
        %508 = vmatpush1.msra.mxu0 %v300
        %509 = vmatprep.subr.mxu0 0.0
        %510 = vmatpush1.msra.mxu0 %v301
        %511 = vmatprep.subr.mxu0 0.0
        %512 = vmatpush1.msra.mxu0 %v302
        %513 = vmatprep.subr.mxu0 0.0
        %514 = vmatpush1.msra.mxu0 %v303
        %515 = vmatprep.mubr.f32.mxu0 %v207
        %516 = vmatmul.mubr.f32.gmra.mrb[0].mxu0 %v206
        %v517 = vpop.f32.mrb[0].mxu0
        %v518 = vadd.f32 %v448, %v517
        %v519 = vpop.f32.mrb[0].mxu0
        %520 = vdwg.mxu0
        %521 = vst [vmem:[%s201] sm:$0xff] %v518
        %s522 = sand.u32 %s97, 1
        %s523 = scalar_lea.sflag [#allocation4], %s522
        %s524 = sand.u32 %s97, 1
        %s525 = smul.addr %s524, 8
        %s526 = scalar_lea.vmem [#allocation7], %s525
        // Predicated region
        $region41: #{tpu_custom_call.1} parent=31 // pred_check
          %p527 = pneg %p107
        $region42: #{tpu_custom_call.1} parent=31 // pred_check_branch
          %529 = sbr.rel (%p527) target = $region44
        $region43: #{tpu_custom_call.1} parent=31 // pred_region
          %s531 = ssub.s32 128, 128
          %532 = vsyncadd %s523, %s531
          %s533 = smul.addr %s21, 128
          %s534 = scalar_lea.hbm %s3, %s533
          %s536 = sshll.u32 %s526, 4
          %s537 = int_to_ptr.vmem [resolvable:$true] %s536
          %539 = dma.vmem_to_hbm [thread:$0]  %s537, 128, %s534, %s523
        $region44: #{tpu_custom_call.1} parent=31 // pred_fallthru
          _
      $region32: #{tpu_custom_call.1} parent=5 // pred_fallthru
        _
      %p540 = scmp.le.s32.totalorder 2, %s16
      // Predicated region
      $region45: #{tpu_custom_call.1} parent=5 // pred_check
        %p541 = pneg %p540
      $region46: #{tpu_custom_call.1} parent=5 // pred_check_branch
        %543 = sbr.rel (%p541) target = $region48
      $region47: #{tpu_custom_call.1} parent=5 // pred_region
        %s544 = ssub.s32 %s16, 2
        // Predicated region
        $region49: #{tpu_custom_call.1} parent=47 // pred_check
          %p545 = pneg %p113
        $region50: #{tpu_custom_call.1} parent=47 // pred_check_branch
          %547 = sbr.rel (%p545) target = $region52
        $region51: #{tpu_custom_call.1} parent=47 // pred_region
          %s548 = sand.u32 %s98, 1
          %s549 = scalar_lea.sflag [#allocation4], %s548
          %s550 = sand.u32 %s98, 1
          %s551 = smul.addr %s550, 8
          %s552 = scalar_lea.vmem [#allocation7], %s551
          %553 = dma.done %s549, 128
        $region52: #{tpu_custom_call.1} parent=47 // pred_fallthru
          _
      $region48: #{tpu_custom_call.1} parent=5 // pred_fallthru
        _
    $region6: #{tpu_custom_call.1} parent=1 // loop_footer
      %s20 = sadd.s32 1, %s16
    $region7: #{tpu_custom_call.1} parent=1 // loop_footer_branch
      %15 = sbr.rel target = $region3
    $region8: #{tpu_custom_call.1} parent=1 // loop_exit
      _
    %554 = vsyncpa [#allocation3], 1
    %s555 = scalar_lea.sflag [#allocation3], 1
    %556 = vsyncpa %s555, 1
    %557 = vsyncpa [#allocation6], 1
    %558 = vsyncpa [#allocation4], 1
    %s559 = scalar_lea.sflag [#allocation4], 1
    %560 = vsyncpa %s559, 1

</llo_original>
